<compile_context>
chip_gen: v7x
topology: tpu7x:2x2x1
jax: 0.10.0
libtpu: 0.0.40
codegen_flags: <defaults>
</compile_context>

<pallas_src>
import jax
import jax.numpy as jnp
from jax import lax
from jax.experimental import pallas as pl
from jax.experimental.pallas import tpu as pltpu

_NEG = -1e30  # fill for padded-vocab bias; exp() underflows to exactly 0.


def w2v_kernel(ids_ref, emb_ref, w1_ref, b1_ref, w2_ref, b2_ref, out_ref):
    # ids_ref: (TB, 1) int32        emb_ref: (V_pad, E) bf16 (resident)
    # w1_ref:  (E, H)  bf16         b1_ref:  (1, H)     f32
    # w2_ref:  (H, V_pad) bf16      b2_ref:  (1, V_pad) f32 (pad cols = -1e30)
    # out_ref: (TB, V_pad) f32
    tb = out_ref.shape[0]
    v_pad = out_ref.shape[1]

    # Fused embedding gather: one-hot(ids) @ emb_table (exact bf16 row select).
    ids = ids_ref[...]                                           # (TB, 1)
    cols = lax.broadcasted_iota(jnp.int32, (tb, v_pad), 1)
    onehot = (cols == ids).astype(emb_ref.dtype)                 # (TB, V_pad)
    x = jnp.dot(onehot, emb_ref[...],
                preferred_element_type=jnp.float32)              # (TB, E) f32

    # l1: F.relu(embeddings) -> Linear; dropout = eval-mode identity.
    x = jnp.maximum(x, 0.0)
    h = jnp.dot(x.astype(w1_ref.dtype), w1_ref[...],
                preferred_element_type=jnp.float32) + b1_ref[...]

    # l2: F.relu(out1) -> Linear.
    h = jnp.maximum(h, 0.0)
    logits = jnp.dot(h.astype(w2_ref.dtype), w2_ref[...],
                     preferred_element_type=jnp.float32) + b2_ref[...]

    # LogSoftmax(dim=1) over the (padded) vocab axis, max-stabilized, f32.
    m = jnp.max(logits, axis=1, keepdims=True)
    shifted = logits - m
    sumexp = jnp.sum(jnp.exp(shifted), axis=1, keepdims=True)
    out_ref[...] = (shifted - jnp.log(sumexp)).astype(out_ref.dtype)


def word2vec_forward(input_ids, emb_table, w1, b1, w2, b2, *, tb=8):
    """word2vec.forward: (B, 1) int ids -> (B, V) f32 log-probs.

    Weights are stored (in_features, out_features) relative to PyTorch's
    (out, in), so the kernel computes x @ W + b.
    """
    B = input_ids.shape[0]
    V, E = emb_table.shape
    H = w1.shape[1]

    v_pad = pl.cdiv(V, 128) * 128          # lane-dense vocab axis
    b_pad = pl.cdiv(B, tb) * tb            # batch padded to the tile size

    ids = jnp.reshape(input_ids.astype(jnp.int32), (B, 1))
    ids = jnp.pad(ids, ((0, b_pad - B), (0, 0)))
    emb_p = jnp.pad(emb_table, ((0, v_pad - V), (0, 0))).astype(jnp.bfloat16)
    w1_b = w1.astype(jnp.bfloat16)
    b1_p = jnp.reshape(b1, (1, H)).astype(jnp.float32)
    w2_p = jnp.pad(w2, ((0, 0), (0, v_pad - V))).astype(jnp.bfloat16)
    b2_p = jnp.pad(jnp.reshape(b2, (1, V)).astype(jnp.float32),
                   ((0, 0), (0, v_pad - V)), constant_values=_NEG)

    grid = (b_pad // tb,)

    def _bytes(a):
        return int(a.size) * a.dtype.itemsize

    cost = pl.CostEstimate(
        flops=2 * b_pad * (v_pad * E + E * H + H * v_pad),
        transcendentals=b_pad * v_pad,
        bytes_accessed=(_bytes(ids) + _bytes(emb_p) + _bytes(w1_b)
                        + _bytes(b1_p) + _bytes(w2_p) + _bytes(b2_p)
                        + b_pad * v_pad * 4),
    )

    out = pl.pallas_call(
        w2v_kernel,
        out_shape=jax.ShapeDtypeStruct((b_pad, v_pad), jnp.float32),
        grid=grid,
        in_specs=[
            pl.BlockSpec((tb, 1), lambda i: (i, 0)),      # ids: streamed per tile
            pl.BlockSpec((v_pad, E), lambda i: (0, 0)),   # emb table: resident
            pl.BlockSpec((E, H), lambda i: (0, 0)),       # w1: resident
            pl.BlockSpec((1, H), lambda i: (0, 0)),       # b1: resident
            pl.BlockSpec((H, v_pad), lambda i: (0, 0)),   # w2: resident
            pl.BlockSpec((1, v_pad), lambda i: (0, 0)),   # b2: resident
        ],
        out_specs=pl.BlockSpec((tb, v_pad), lambda i: (i, 0)),
        compiler_params=pltpu.CompilerParams(
            dimension_semantics=("parallel",)),
        cost_estimate=cost,
    )(ids, emb_p, w1_b, b1_p, w2_p, b2_p)

    return out[:B, :V]


if __name__ == "__main__":
    VOCAB = 64       # vocabulary_size
    EMB = 16         # embedding_dims
    HIDDEN = 32      # l1 output size (fixed in the module)
    BATCH = 16

    key = jax.random.PRNGKey(0)
    k_emb, k_w1, k_b1, k_w2, k_b2, k_in = jax.random.split(key, 6)

    emb_table = jax.random.normal(k_emb, (VOCAB, EMB), dtype=jnp.float32)
    w1 = jax.random.normal(k_w1, (EMB, HIDDEN), dtype=jnp.float32) * 0.1
    b1 = jax.random.normal(k_b1, (1, HIDDEN), dtype=jnp.float32) * 0.1
    w2 = jax.random.normal(k_w2, (HIDDEN, VOCAB), dtype=jnp.float32) * 0.1
    b2 = jax.random.normal(k_b2, (1, VOCAB), dtype=jnp.float32) * 0.1

    # input: (B, 1) token indices, as the squeeze() in forward implies.
    input_ids = jax.random.randint(k_in, (BATCH, 1), 0, VOCAB, dtype=jnp.int32)

    log_probs = word2vec_forward(input_ids, emb_table, w1, b1, w2, b2, tb=8)
    jax.block_until_ready(log_probs)

    # Reference mirroring the kernel numerics (bf16 MXU operands, f32 accum,
    # eval-mode dropout).
    x = jnp.take(emb_table.astype(jnp.bfloat16).astype(jnp.float32),
                 input_ids.reshape(-1), axis=0)
    x = jnp.maximum(x, 0.0)
    h = jnp.dot(x.astype(jnp.bfloat16), w1.astype(jnp.bfloat16),
                preferred_element_type=jnp.float32) + b1
    h = jnp.maximum(h, 0.0)
    logits = jnp.dot(h.astype(jnp.bfloat16), w2.astype(jnp.bfloat16),
                     preferred_element_type=jnp.float32) + b2
    ref = jax.nn.log_softmax(logits, axis=1)

    assert log_probs.shape == (BATCH, VOCAB)
    assert jnp.allclose(log_probs, ref, atol=1e-3, rtol=1e-3), \
        "mismatch vs reference"
    print("KERNEL_OK")
</pallas_src>

<mosaic_0001>
module attributes {stable_mosaic.version = 11 : i64} {
  func.func @w2v_kernel(%arg0: i32, %arg1: memref<8x1xi32, #tpu.memory_space<vmem>>, %arg2: memref<128x16xbf16, #tpu.memory_space<vmem>>, %arg3: memref<16x32xbf16, #tpu.memory_space<vmem>>, %arg4: memref<1x32xf32, #tpu.memory_space<vmem>>, %arg5: memref<32x128xbf16, #tpu.memory_space<vmem>>, %arg6: memref<1x128xf32, #tpu.memory_space<vmem>>, %arg7: memref<8x128xf32, #tpu.memory_space<vmem>>) attributes {dimension_semantics = [#tpu.dimension_semantics<parallel>], iteration_bounds = array<i64: 2>, scalar_prefetch = 0 : i64, scratch_operands = 0 : i64, tpu.core_type = #tpu.core_type<tc>, window_params = [{transform_indices = @transform_0, window_bounds = array<i64: 8, 1>}, {pipeline_mode = #tpu.pipeline_mode<synchronous>, transform_indices = @transform_1, window_bounds = array<i64: 128, 16>}, {pipeline_mode = #tpu.pipeline_mode<synchronous>, transform_indices = @transform_2, window_bounds = array<i64: 16, 32>}, {pipeline_mode = #tpu.pipeline_mode<synchronous>, transform_indices = @transform_3, window_bounds = array<i64: 1, 32>}, {pipeline_mode = #tpu.pipeline_mode<synchronous>, transform_indices = @transform_4, window_bounds = array<i64: 32, 128>}, {pipeline_mode = #tpu.pipeline_mode<synchronous>, transform_indices = @transform_5, window_bounds = array<i64: 1, 128>}, {transform_indices = @transform_6, window_bounds = array<i64: 8, 128>}]} {
    %c0 = arith.constant 0 : index
    %c0_0 = arith.constant 0 : index
    %0 = vector.load %arg1[%c0, %c0_0] : memref<8x1xi32, #tpu.memory_space<vmem>>, vector<8x1xi32>
    %1 = tpu.iota {dimensions = array<i32: 1>} : vector<8x128xi32>
    %2 = vector.broadcast %0 : vector<8x1xi32> to vector<8x128xi32>
    %3 = arith.cmpi eq, %1, %2 : vector<8x128xi32>
    %4 = arith.extui %3 : vector<8x128xi1> to vector<8x128xi32>
    %5 = arith.sitofp %4 : vector<8x128xi32> to vector<8x128xf32>
    %6 = arith.truncf %5 : vector<8x128xf32> to vector<8x128xbf16>
    %c0_1 = arith.constant 0 : index
    %c0_2 = arith.constant 0 : index
    %7 = vector.load %arg2[%c0_1, %c0_2] : memref<128x16xbf16, #tpu.memory_space<vmem>>, vector<128x16xbf16>
    %cst = arith.constant dense<0.000000e+00> : vector<8x16xf32>
    %8 = tpu.matmul %6, %7, %cst {dimension_numbers = #tpu.dot_dimension_numbers<[1], [0], [0], [1], [0, 0, 1, 1], [], []>} : vector<8x128xbf16>, vector<128x16xbf16>, vector<8x16xf32> -> vector<8x16xf32>
    %cst_3 = arith.constant 0.000000e+00 : f32
    %9 = vector.broadcast %cst_3 : f32 to vector<8x16xf32>
    %10 = arith.maximumf %8, %9 : vector<8x16xf32>
    %11 = arith.truncf %10 : vector<8x16xf32> to vector<8x16xbf16>
    %c0_4 = arith.constant 0 : index
    %c0_5 = arith.constant 0 : index
    %12 = vector.load %arg3[%c0_4, %c0_5] : memref<16x32xbf16, #tpu.memory_space<vmem>>, vector<16x32xbf16>
    %cst_6 = arith.constant dense<0.000000e+00> : vector<8x32xf32>
    %13 = tpu.matmul %11, %12, %cst_6 {dimension_numbers = #tpu.dot_dimension_numbers<[1], [0], [0], [1], [0, 0, 1, 1], [], []>} : vector<8x16xbf16>, vector<16x32xbf16>, vector<8x32xf32> -> vector<8x32xf32>
    %c0_7 = arith.constant 0 : index
    %c0_8 = arith.constant 0 : index
    %14 = vector.load %arg4[%c0_7, %c0_8] : memref<1x32xf32, #tpu.memory_space<vmem>>, vector<1x32xf32>
    %15 = vector.broadcast %14 : vector<1x32xf32> to vector<8x32xf32>
    %16 = arith.addf %13, %15 : vector<8x32xf32>
    %cst_9 = arith.constant 0.000000e+00 : f32
    %17 = vector.broadcast %cst_9 : f32 to vector<8x32xf32>
    %18 = arith.maximumf %16, %17 : vector<8x32xf32>
    %19 = arith.truncf %18 : vector<8x32xf32> to vector<8x32xbf16>
    %c0_10 = arith.constant 0 : index
    %c0_11 = arith.constant 0 : index
    %20 = vector.load %arg5[%c0_10, %c0_11] : memref<32x128xbf16, #tpu.memory_space<vmem>>, vector<32x128xbf16>
    %cst_12 = arith.constant dense<0.000000e+00> : vector<8x128xf32>
    %21 = tpu.matmul %19, %20, %cst_12 {dimension_numbers = #tpu.dot_dimension_numbers<[1], [0], [0], [1], [0, 0, 1, 1], [], []>} : vector<8x32xbf16>, vector<32x128xbf16>, vector<8x128xf32> -> vector<8x128xf32>
    %c0_13 = arith.constant 0 : index
    %c0_14 = arith.constant 0 : index
    %22 = vector.load %arg6[%c0_13, %c0_14] : memref<1x128xf32, #tpu.memory_space<vmem>>, vector<1x128xf32>
    %23 = vector.broadcast %22 : vector<1x128xf32> to vector<8x128xf32>
    %24 = arith.addf %21, %23 : vector<8x128xf32>
    %cst_15 = arith.constant dense<0xFF800000> : vector<8xf32>
    %25 = vector.multi_reduction <maximumf>, %24, %cst_15 [1] : vector<8x128xf32> to vector<8xf32>
    %26 = vector.shape_cast %25 : vector<8xf32> to vector<8x1xf32>
    %27 = vector.broadcast %26 : vector<8x1xf32> to vector<8x128xf32>
    %28 = arith.subf %24, %27 : vector<8x128xf32>
    %29 = math.exp %28 : vector<8x128xf32>
    %cst_16 = arith.constant dense<0.000000e+00> : vector<8xf32>
    %30 = vector.multi_reduction <add>, %29, %cst_16 [1] : vector<8x128xf32> to vector<8xf32>
    %31 = vector.shape_cast %30 : vector<8xf32> to vector<8x1xf32>
    %32 = math.log %31 : vector<8x1xf32>
    %33 = vector.broadcast %32 : vector<8x1xf32> to vector<8x128xf32>
    %34 = arith.subf %28, %33 : vector<8x128xf32>
    %c0_17 = arith.constant 0 : index
    %c0_18 = arith.constant 0 : index
    %35 = vector.load %arg7[%c0_17, %c0_18] : memref<8x128xf32, #tpu.memory_space<vmem>>, vector<8x128xf32>
    tpu.vector_store %arg7[%c0_17, %c0_18], %34 {strides = array<i32>} : memref<8x128xf32, #tpu.memory_space<vmem>>, vector<8x128xf32>,
    return
  }
  func.func @transform_0(%arg0: i32) -> (i32, i32) {
    %c0_i32 = arith.constant 0 : i32
    %c0_i32_0 = arith.constant 0 : i32
    return %arg0, %c0_i32 : i32, i32
  }
  func.func @transform_1(%arg0: i32) -> (i32, i32) {
    %c0_i32 = arith.constant 0 : i32
    %c0_i32_0 = arith.constant 0 : i32
    %c0_i32_1 = arith.constant 0 : i32
    return %c0_i32, %c0_i32_0 : i32, i32
  }
  func.func @transform_2(%arg0: i32) -> (i32, i32) {
    %c0_i32 = arith.constant 0 : i32
    %c0_i32_0 = arith.constant 0 : i32
    %c0_i32_1 = arith.constant 0 : i32
    return %c0_i32, %c0_i32_0 : i32, i32
  }
  func.func @transform_3(%arg0: i32) -> (i32, i32) {
    %c0_i32 = arith.constant 0 : i32
    %c0_i32_0 = arith.constant 0 : i32
    %c0_i32_1 = arith.constant 0 : i32
    return %c0_i32, %c0_i32_0 : i32, i32
  }
  func.func @transform_4(%arg0: i32) -> (i32, i32) {
    %c0_i32 = arith.constant 0 : i32
    %c0_i32_0 = arith.constant 0 : i32
    %c0_i32_1 = arith.constant 0 : i32
    return %c0_i32, %c0_i32_0 : i32, i32
  }
  func.func @transform_5(%arg0: i32) -> (i32, i32) {
    %c0_i32 = arith.constant 0 : i32
    %c0_i32_0 = arith.constant 0 : i32
    %c0_i32_1 = arith.constant 0 : i32
    return %c0_i32, %c0_i32_0 : i32, i32
  }
  func.func @transform_6(%arg0: i32) -> (i32, i32) {
    %c0_i32 = arith.constant 0 : i32
    %c0_i32_0 = arith.constant 0 : i32
    return %arg0, %c0_i32 : i32, i32
  }
}

</mosaic_0001>

<llo_original>
// kernel: tpu_custom_call.1
$region0: #{tpu_custom_call.1}
  #allocation0 [shape = 'u32[]', space=smem, size = 0x4, offset = 0x4, fixed_abs, tag = 'smem constant byte address 0x4 - core index']
  #allocation1 [shape = 'u32[144,128]{1,0:T(1,128)}', space=vmem, size = 0x12000, scoped, tag = 'internal scratch']
  %s0 = inlined_call_operand.vmem [shape: s32[16,1], index: 0, kind: input, shape index: {}]
  %s1 = inlined_call_operand.vmem [shape: bf16[128,16], index: 1, kind: input, shape index: {}]
  %s2 = inlined_call_operand.vmem [shape: bf16[16,32], index: 2, kind: input, shape index: {}]
  %s3 = inlined_call_operand.vmem [shape: f32[1,32], index: 3, kind: input, shape index: {}]
  %s4 = inlined_call_operand.vmem [shape: bf16[32,128], index: 4, kind: input, shape index: {}]
  %s5 = inlined_call_operand.vmem [shape: f32[1,128], index: 5, kind: input, shape index: {}]
  %s6 = inlined_call_operand.hbm [shape: f32[16,128], index: 6, kind: output, shape index: {}]
  %s7 = sld [smem:[#allocation0]]
  $region57: #{tpu_custom_call.1} parent=0
    _
  %s9 = ssub.s32 1, %s7
  %s10 = scalar_select 0, %s9, %s7
  $region1: #{tpu_custom_call.1} parent=0
    #allocation2 [shape = 'u8[8192]{0}', space=vmem, size = 0x2000, scoped, tag = 'output window, operand 0']
    #allocation3 [shape = 's32[2]{0}', space=sflag, size = 0x8, scoped, tag = 'scoped memory for tpu_custom_call.1']
    %11 = vsyncpa [#allocation3], 0
    %s12 = scalar_lea.sflag [#allocation3], 1
    %13 = vsyncpa %s12, 0
    loop: start=0, step=1, limit=4
    $region2: #{tpu_custom_call.1} parent=1 // loop_pre_header
      _
    $region3: #{tpu_custom_call.1} parent=1 // loop_header
      %s15 = sphi 0, %s19
      %p16 = scmp.ge.s32.totalorder %s15, 4
      %s25 = sphi 0, %s27
      %s28 = sphi 0, %s25
      %s29 = sphi 0, %s28
      %s45 = sphi 0, %s29
      %s49 = sphi 0, %s49
      %s51 = sphi 0, %s49
      %s52 = sphi 0, %s51
      %s66 = sphi 0, %s52
      %s70 = sphi 0, %s70
      %s72 = sphi 0, %s70
      %s73 = sphi 0, %s72
      %s87 = sphi 0, %s73
      %s91 = sphi 0, %s91
      %s93 = sphi 0, %s91
      %s94 = sphi 0, %s93
      %s108 = sphi 0, %s94
      %s112 = sphi 0, %s112
      %s114 = sphi 0, %s112
      %s115 = sphi 0, %s114
      %s129 = sphi 0, %s115
      %s133 = sphi 0, %s133
      %s135 = sphi 0, %s133
      %s136 = sphi 0, %s135
      %s150 = sphi 0, %s136
      %s156 = sphi 0, %s158
      %s159 = sphi 0, %s156
      %s160 = sphi 0, %s159
      %s176 = sphi 0, %s160
    $region4: #{tpu_custom_call.1} parent=1 // loop_header_branch
      %18 = sbr.rel (%p16) target = $region8
    $region5: #{tpu_custom_call.1} parent=1 // loop_body
      %s20 = ssub.s32 %s15, 1
      %s21 = ssub.s32 %s15, 2
      %s22 = sadd.s32 %s15, 1
      %s23 = ssub.s32 %s15, %s22
      %p24 = scmp.eq.s32.totalorder %s23, 0
      %s26 = sadd.s32 %s25, 1
      %s27 = scalar_select %p24, %s25, %s26
      %p30 = pneg %p24
      %p31 = scmp.eq.s32.totalorder %s15, 1
      %p32 = por %p30, %p31
      %p33 = scmp.ne.s32.totalorder %s25, %s28
      %p34 = scmp.eq.s32.totalorder %s15, 0
      %p35 = por %p33, %p34
      %p36 = scmp.ne.s32.totalorder %s25, %s28
      %p37 = scmp.eq.s32.totalorder %s20, 1
      %p38 = por %p36, %p37
      %p39 = scmp.ne.s32.totalorder %s28, %s29
      %p40 = scmp.eq.s32.totalorder %s20, 0
      %p41 = por %p39, %p40
      %p42 = scmp.ne.s32.totalorder %s28, %s29
      %p43 = scmp.eq.s32.totalorder %s21, 1
      %p44 = por %p42, %p43
      %p46 = scmp.ne.s32.totalorder %s29, %s45
      %p47 = scmp.eq.s32.totalorder %s21, 0
      %p48 = por %p46, %p47
      %s50 = sadd.s32 %s49, 1
      %p53 = scmp.eq.s32.totalorder %s15, 1
      %p54 = scmp.ne.s32.totalorder %s49, %s51
      %p55 = scmp.eq.s32.totalorder %s15, 0
      %p56 = por %p54, %p55
      %p57 = scmp.ne.s32.totalorder %s49, %s51
      %p58 = scmp.eq.s32.totalorder %s20, 1
      %p59 = por %p57, %p58
      %p60 = scmp.ne.s32.totalorder %s51, %s52
      %p61 = scmp.eq.s32.totalorder %s20, 0
      %p62 = por %p60, %p61
      %p63 = scmp.ne.s32.totalorder %s51, %s52
      %p64 = scmp.eq.s32.totalorder %s21, 1
      %p65 = por %p63, %p64
      %p67 = scmp.ne.s32.totalorder %s52, %s66
      %p68 = scmp.eq.s32.totalorder %s21, 0
      %p69 = por %p67, %p68
      %s71 = sadd.s32 %s70, 1
      %p74 = scmp.eq.s32.totalorder %s15, 1
      %p75 = scmp.ne.s32.totalorder %s70, %s72
      %p76 = scmp.eq.s32.totalorder %s15, 0
      %p77 = por %p75, %p76
      %p78 = scmp.ne.s32.totalorder %s70, %s72
      %p79 = scmp.eq.s32.totalorder %s20, 1
      %p80 = por %p78, %p79
      %p81 = scmp.ne.s32.totalorder %s72, %s73
      %p82 = scmp.eq.s32.totalorder %s20, 0
      %p83 = por %p81, %p82
      %p84 = scmp.ne.s32.totalorder %s72, %s73
      %p85 = scmp.eq.s32.totalorder %s21, 1
      %p86 = por %p84, %p85
      %p88 = scmp.ne.s32.totalorder %s73, %s87
      %p89 = scmp.eq.s32.totalorder %s21, 0
      %p90 = por %p88, %p89
      %s92 = sadd.s32 %s91, 1
      %p95 = scmp.eq.s32.totalorder %s15, 1
      %p96 = scmp.ne.s32.totalorder %s91, %s93
      %p97 = scmp.eq.s32.totalorder %s15, 0
      %p98 = por %p96, %p97
      %p99 = scmp.ne.s32.totalorder %s91, %s93
      %p100 = scmp.eq.s32.totalorder %s20, 1
      %p101 = por %p99, %p100
      %p102 = scmp.ne.s32.totalorder %s93, %s94
      %p103 = scmp.eq.s32.totalorder %s20, 0
      %p104 = por %p102, %p103
      %p105 = scmp.ne.s32.totalorder %s93, %s94
      %p106 = scmp.eq.s32.totalorder %s21, 1
      %p107 = por %p105, %p106
      %p109 = scmp.ne.s32.totalorder %s94, %s108
      %p110 = scmp.eq.s32.totalorder %s21, 0
      %p111 = por %p109, %p110
      %s113 = sadd.s32 %s112, 1
      %p116 = scmp.eq.s32.totalorder %s15, 1
      %p117 = scmp.ne.s32.totalorder %s112, %s114
      %p118 = scmp.eq.s32.totalorder %s15, 0
      %p119 = por %p117, %p118
      %p120 = scmp.ne.s32.totalorder %s112, %s114
      %p121 = scmp.eq.s32.totalorder %s20, 1
      %p122 = por %p120, %p121
      %p123 = scmp.ne.s32.totalorder %s114, %s115
      %p124 = scmp.eq.s32.totalorder %s20, 0
      %p125 = por %p123, %p124
      %p126 = scmp.ne.s32.totalorder %s114, %s115
      %p127 = scmp.eq.s32.totalorder %s21, 1
      %p128 = por %p126, %p127
      %p130 = scmp.ne.s32.totalorder %s115, %s129
      %p131 = scmp.eq.s32.totalorder %s21, 0
      %p132 = por %p130, %p131
      %s134 = sadd.s32 %s133, 1
      %p137 = scmp.eq.s32.totalorder %s15, 1
      %p138 = scmp.ne.s32.totalorder %s133, %s135
      %p139 = scmp.eq.s32.totalorder %s15, 0
      %p140 = por %p138, %p139
      %p141 = scmp.ne.s32.totalorder %s133, %s135
      %p142 = scmp.eq.s32.totalorder %s20, 1
      %p143 = por %p141, %p142
      %p144 = scmp.ne.s32.totalorder %s135, %s136
      %p145 = scmp.eq.s32.totalorder %s20, 0
      %p146 = por %p144, %p145
      %p147 = scmp.ne.s32.totalorder %s135, %s136
      %p148 = scmp.eq.s32.totalorder %s21, 1
      %p149 = por %p147, %p148
      %p151 = scmp.ne.s32.totalorder %s136, %s150
      %p152 = scmp.eq.s32.totalorder %s21, 0
      %p153 = por %p151, %p152
      %s154 = ssub.s32 %s15, %s22
      %p155 = scmp.eq.s32.totalorder %s154, 0
      %s157 = sadd.s32 %s156, 1
      %s158 = scalar_select %p155, %s156, %s157
      %p161 = pneg %p155
      %p162 = scmp.eq.s32.totalorder %s15, 1
      %p163 = por %p161, %p162
      %p164 = scmp.ne.s32.totalorder %s156, %s159
      %p165 = scmp.eq.s32.totalorder %s15, 0
      %p166 = por %p164, %p165
      %p167 = scmp.ne.s32.totalorder %s156, %s159
      %p168 = scmp.eq.s32.totalorder %s20, 1
      %p169 = por %p167, %p168
      %p170 = scmp.ne.s32.totalorder %s159, %s160
      %p171 = scmp.eq.s32.totalorder %s20, 0
      %p172 = por %p170, %p171
      %p173 = scmp.ne.s32.totalorder %s159, %s160
      %p174 = scmp.eq.s32.totalorder %s21, 1
      %p175 = por %p173, %p174
      %p177 = scmp.ne.s32.totalorder %s160, %s176
      %p178 = scmp.eq.s32.totalorder %s21, 0
      %p179 = por %p177, %p178
      %p180 = scmp.le.s32.totalorder 1, %s15
      %p181 = scmp.lt.s32.totalorder %s15, 3
      %p182 = pnand %p180, %p181
      %p183 = pneg %p182
      // Predicated region
      $region9: #{tpu_custom_call.1} parent=5 // pred_check
        _
      $region10: #{tpu_custom_call.1} parent=5 // pred_check_branch
        %185 = sbr.rel (%p182) target = $region12
      $region11: #{tpu_custom_call.1} parent=5 // pred_region
        %s186 = ssub.s32 %s15, 1
        // Predicated region
        $region13: #{tpu_custom_call.1} parent=11 // pred_check
          %p187 = pneg %p62
        $region14: #{tpu_custom_call.1} parent=11 // pred_check_branch
          %189 = sbr.rel (%p187) target = $region16
        $region15: #{tpu_custom_call.1} parent=11 // pred_region
          _
        $region16: #{tpu_custom_call.1} parent=11 // pred_fallthru
          _
        // Predicated region
        $region17: #{tpu_custom_call.1} parent=11 // pred_check
          %p190 = pneg %p83
        $region18: #{tpu_custom_call.1} parent=11 // pred_check_branch
          %192 = sbr.rel (%p190) target = $region20
        $region19: #{tpu_custom_call.1} parent=11 // pred_region
          _
        $region20: #{tpu_custom_call.1} parent=11 // pred_fallthru
          _
        // Predicated region
        $region21: #{tpu_custom_call.1} parent=11 // pred_check
          %p193 = pneg %p104
        $region22: #{tpu_custom_call.1} parent=11 // pred_check_branch
          %195 = sbr.rel (%p193) target = $region24
        $region23: #{tpu_custom_call.1} parent=11 // pred_region
          _
        $region24: #{tpu_custom_call.1} parent=11 // pred_fallthru
          _
        // Predicated region
        $region25: #{tpu_custom_call.1} parent=11 // pred_check
          %p196 = pneg %p125
        $region26: #{tpu_custom_call.1} parent=11 // pred_check_branch
          %198 = sbr.rel (%p196) target = $region28
        $region27: #{tpu_custom_call.1} parent=11 // pred_region
          _
        $region28: #{tpu_custom_call.1} parent=11 // pred_fallthru
          _
        // Predicated region
        $region29: #{tpu_custom_call.1} parent=11 // pred_check
          %p199 = pneg %p146
        $region30: #{tpu_custom_call.1} parent=11 // pred_check_branch
          %201 = sbr.rel (%p199) target = $region32
        $region31: #{tpu_custom_call.1} parent=11 // pred_region
          _
        $region32: #{tpu_custom_call.1} parent=11 // pred_fallthru
          _
      $region12: #{tpu_custom_call.1} parent=5 // pred_fallthru
        _
      %p202 = scmp.lt.s32.totalorder %s15, 2
      // Predicated region
      $region33: #{tpu_custom_call.1} parent=5 // pred_check
        %p203 = pneg %p202
      $region34: #{tpu_custom_call.1} parent=5 // pred_check_branch
        %205 = sbr.rel (%p203) target = $region36
      $region35: #{tpu_custom_call.1} parent=5 // pred_region
        // Predicated region
        $region37: #{tpu_custom_call.1} parent=35 // pred_check
          %p206 = pneg %p35
        $region38: #{tpu_custom_call.1} parent=35 // pred_check_branch
          %208 = sbr.rel (%p206) target = $region40
        $region39: #{tpu_custom_call.1} parent=35 // pred_region
          %p209 = scmp.lt.s32.totalorder %s15, 1
          %s210 = scalar_select %p209, %s15, 1
          %s211 = smul.addr %s210, 8
          %s212 = scalar_lea.vmem %s0, %s211
        $region40: #{tpu_custom_call.1} parent=35 // pred_fallthru
          _
      $region36: #{tpu_custom_call.1} parent=5 // pred_fallthru
        _
      %p213 = scmp.le.s32.totalorder 1, %s15
      %p214 = scmp.lt.s32.totalorder %s15, 3
      %p215 = pnand %p213, %p214
      %p216 = pneg %p215
      // Predicated region
      $region41: #{tpu_custom_call.1} parent=5 // pred_check
        _
      $region42: #{tpu_custom_call.1} parent=5 // pred_check_branch
        %218 = sbr.rel (%p215) target = $region44
      $region43: #{tpu_custom_call.1} parent=5 // pred_region
        %s219 = ssub.s32 %s15, 1
        %p220 = scmp.lt.s32.totalorder %s20, 1
        %s221 = scalar_select %p220, %s20, 1
        %s222 = smul.addr %s221, 8
        %s223 = scalar_lea.vmem %s0, %s222
        %p224 = pneg %p41
        %p225 = pneg %p38
        %p226 = pneg %p62
        %p227 = pneg %p59
        %p228 = pneg %p83
        %p229 = pneg %p80
        %p230 = pneg %p104
        %p231 = pneg %p101
        %p232 = pneg %p125
        %p233 = pneg %p122
        %p234 = pneg %p146
        %p235 = pneg %p143
        %p236 = pneg %p172
        %p237 = pneg %p169
        %s238 = sand.u32 %s159, 1
        %s239 = scalar_lea.sflag [#allocation3], %s238
        %s240 = sand.u32 %s159, 1
        %s241 = smul.addr %s240, 8
        %s242 = scalar_lea.vmem [#allocation2], %s241
        %p243 = scmp.lt.s32.totalorder %s20, 1
        %s244 = scalar_select %p243, %s20, 1
        %s245 = smul.addr %s244, 8
        %s246 = scalar_lea.vmem %s0, %s245
        %v248 = vld [vmem:[%s246] sm:$0xff]
        %v249 = vlaneseq
        %v250 = vand.u32 %v249, 127
        %251 = vset.pattern.permute.xlu0 0
        %252 = vperm.xlu0 %251, %v248
        %v253 = vpop.permute.xlu0 %252
        %vm254 = vcmp.eq.s32.totalorder %v250, %v253
        %v255 = vsel %vm254, 1, 0
        %v256 = vcvt.s32.f32 %v255
        %v257 = vpack.c.bf16 %v256, %v256
        %v258 = vld [vmem:[%s1] sm:$0xf]
        %v259 = vld [vmem:[%s1 + $0x4] sm:$0xf]
        %v260 = vld [vmem:[%s1 + $0x8] sm:$0xf]
        %v261 = vld [vmem:[%s1 + $0xc] sm:$0xf]
        %v262 = vld [vmem:[%s1 + $0x10] sm:$0xf]
        %v263 = vld [vmem:[%s1 + $0x14] sm:$0xf]
        %v264 = vld [vmem:[%s1 + $0x18] sm:$0xf]
        %v265 = vld [vmem:[%s1 + $0x1c] sm:$0xf]
        %v266 = vld [vmem:[%s1 + $0x20] sm:$0xf]
        %v267 = vld [vmem:[%s1 + $0x24] sm:$0xf]
        %v268 = vld [vmem:[%s1 + $0x28] sm:$0xf]
        %v269 = vld [vmem:[%s1 + $0x2c] sm:$0xf]
        %v270 = vld [vmem:[%s1 + $0x30] sm:$0xf]
        %v271 = vld [vmem:[%s1 + $0x34] sm:$0xf]
        %v272 = vld [vmem:[%s1 + $0x38] sm:$0xf]
        %v273 = vld [vmem:[%s1 + $0x3c] sm:$0xf]
        %v290 = vunpack.c.l.b16 %v258
        %v291 = vunpack.c.l.b16 %v259
        %v292 = vunpack.c.l.b16 %v260
        %v293 = vunpack.c.l.b16 %v261
        %v294 = vunpack.c.l.b16 %v262
        %v295 = vunpack.c.l.b16 %v263
        %v296 = vunpack.c.l.b16 %v264
        %v297 = vunpack.c.l.b16 %v265
        %v298 = vunpack.c.l.b16 %v266
        %v299 = vunpack.c.l.b16 %v267
        %v300 = vunpack.c.l.b16 %v268
        %v301 = vunpack.c.l.b16 %v269
        %v302 = vunpack.c.l.b16 %v270
        %v303 = vunpack.c.l.b16 %v271
        %v304 = vunpack.c.l.b16 %v272
        %v305 = vunpack.c.l.b16 %v273
        %v306 = vpack.c.b16 %v291, %v290
        %v307 = vpack.c.b16 %v293, %v292
        %v308 = vpack.c.b16 %v295, %v294
        %v309 = vpack.c.b16 %v297, %v296
        %v310 = vpack.c.b16 %v299, %v298
        %v311 = vpack.c.b16 %v301, %v300
        %v312 = vpack.c.b16 %v303, %v302
        %v313 = vpack.c.b16 %v305, %v304
        %322 = vmatprep.subr.bf16.mxu0 0
        %323 = vmatpush1.bf16.msra.mxu0 %v306
        %324 = vmatprep.subr.bf16.mxu0 0
        %325 = vmatpush1.bf16.msra.mxu0 %v307
        %326 = vmatprep.subr.bf16.mxu0 0
        %327 = vmatpush1.bf16.msra.mxu0 %v308
        %328 = vmatprep.subr.bf16.mxu0 0
        %329 = vmatpush1.bf16.msra.mxu0 %v309
        %330 = vmatprep.subr.bf16.mxu0 0
        %331 = vmatpush1.bf16.msra.mxu0 %v310
        %332 = vmatprep.subr.bf16.mxu0 0
        %333 = vmatpush1.bf16.msra.mxu0 %v311
        %334 = vmatprep.subr.bf16.mxu0 0
        %335 = vmatpush1.bf16.msra.mxu0 %v312
        %336 = vmatprep.subr.bf16.mxu0 0
        %337 = vmatpush1.bf16.msra.mxu0 %v313
        %338 = vmatprep.subr.bf16.mxu0 0
        %339 = vmatpush1.bf16.msra.mxu0 0
        %340 = vmatprep.subr.bf16.mxu0 0
        %341 = vmatpush1.bf16.msra.mxu0 0
        %342 = vmatprep.subr.bf16.mxu0 0
        %343 = vmatpush1.bf16.msra.mxu0 0
        %344 = vmatprep.subr.bf16.mxu0 0
        %345 = vmatpush1.bf16.msra.mxu0 0
        %346 = vmatprep.subr.bf16.mxu0 0
        %347 = vmatpush1.bf16.msra.mxu0 0
        %348 = vmatprep.subr.bf16.mxu0 0
        %349 = vmatpush1.bf16.msra.mxu0 0
        %350 = vmatprep.subr.bf16.mxu0 0
        %351 = vmatpush1.bf16.msra.mxu0 0
        %352 = vmatprep.subr.bf16.mxu0 0
        %353 = vmatpush1.bf16.msra.mxu0 0
        %354 = vmatprep.mubr.bf16.mxu0 0
        %355 = vmatmul.mubr.bf16.gmra.mrb[0].mxu0 %v257
        %v356 = vpop.f32.mrb[0].mxu0
        %v357 = vadd.f32 0.0, %v356
        %v358 = vpop.f32.mrb[0].mxu0
        %v359 = vpop.f32.mrb[0].mxu0
        %v360 = vpop.f32.mrb[0].mxu0
        %361 = vdwg.mxu0
        %v362 = vmax.f32 %v357, 0.0
        %v363 = vpack.c.bf16 %v362, %v362
        %v364 = vld [vmem:[%s2] sm:$0xf]
        %v365 = vld [vmem:[%s2 + $0x4] sm:$0xf]
        %v366 = vld [vmem:[%s3] sm:$0x1]
        %v368 = vlaneseq
        %v369 = vshrl.u32 %v368, 7
        %v370 = vsub.s32 0, %v369
        %v371 = vrot.slane %v366, %v370
        %v375 = vunpack.c.l.b16 %v364
        %v376 = vunpack.c.l.b16 %v365
        %v377 = vpack.c.b16 %v376, %v375
        %vm379 = vcmask 130048
        %v381 = vsel %vm379, %v363, 0
        %383 = vmatprep.subr.bf16.mxu0 0
        %384 = vmatpush1.bf16.msra.mxu0 %v377
        %385 = vmatprep.subr.bf16.mxu0 0
        %386 = vmatpush1.bf16.msra.mxu0 0
        %387 = vmatprep.subr.bf16.mxu0 0
        %388 = vmatpush1.bf16.msra.mxu0 0
        %389 = vmatprep.subr.bf16.mxu0 0
        %390 = vmatpush1.bf16.msra.mxu0 0
        %391 = vmatprep.subr.bf16.mxu0 0
        %392 = vmatpush1.bf16.msra.mxu0 0
        %393 = vmatprep.subr.bf16.mxu0 0
        %394 = vmatpush1.bf16.msra.mxu0 0
        %395 = vmatprep.subr.bf16.mxu0 0
        %396 = vmatpush1.bf16.msra.mxu0 0
        %397 = vmatprep.subr.bf16.mxu0 0
        %398 = vmatpush1.bf16.msra.mxu0 0
        %399 = vmatprep.subr.bf16.mxu0 0
        %400 = vmatpush1.bf16.msra.mxu0 0
        %401 = vmatprep.subr.bf16.mxu0 0
        %402 = vmatpush1.bf16.msra.mxu0 0
        %403 = vmatprep.subr.bf16.mxu0 0
        %404 = vmatpush1.bf16.msra.mxu0 0
        %405 = vmatprep.subr.bf16.mxu0 0
        %406 = vmatpush1.bf16.msra.mxu0 0
        %407 = vmatprep.subr.bf16.mxu0 0
        %408 = vmatpush1.bf16.msra.mxu0 0
        %409 = vmatprep.subr.bf16.mxu0 0
        %410 = vmatpush1.bf16.msra.mxu0 0
        %411 = vmatprep.subr.bf16.mxu0 0
        %412 = vmatpush1.bf16.msra.mxu0 0
        %413 = vmatprep.subr.bf16.mxu0 0
        %414 = vmatpush1.bf16.msra.mxu0 0
        %415 = vmatprep.mubr.bf16.mxu0 0
        %416 = vmatmul.mubr.bf16.gmra.mrb[0].mxu0 %v381
        %v417 = vpop.f32.mrb[0].mxu0
        %v418 = vadd.f32 %v371, %v417
        %v419 = vpop.f32.mrb[0].mxu0
        %v420 = vpop.f32.mrb[0].mxu0
        %v421 = vpop.f32.mrb[0].mxu0
        %422 = vdwg.mxu0
        %v423 = vmax.f32 %v418, 0.0
        %v424 = vpack.c.bf16 %v423, %v423
        %v425 = vld [vmem:[%s4] sm:$0xf]
        %v426 = vld [vmem:[%s4 + $0x4] sm:$0xf]
        %v427 = vld [vmem:[%s4 + $0x8] sm:$0xf]
        %v428 = vld [vmem:[%s4 + $0xc] sm:$0xf]
        %v429 = vld [vmem:[%s5] sm:$0x1]
        %v431 = vlaneseq
        %v432 = vshrl.u32 %v431, 7
        %v433 = vsub.s32 0, %v432
        %v434 = vrot.slane %v429, %v433
        %v440 = vunpack.c.l.b16 %v425
        %v441 = vunpack.c.l.b16 %v426
        %v442 = vunpack.c.l.b16 %v427
        %v443 = vunpack.c.l.b16 %v428
        %v444 = vpack.c.b16 %v441, %v440
        %v445 = vpack.c.b16 %v443, %v442
        %vm448 = vcmask 261120
        %v450 = vsel %vm448, %v424, 0
        %452 = vmatprep.subr.bf16.mxu0 0
        %453 = vmatpush1.bf16.msra.mxu0 %v444
        %454 = vmatprep.subr.bf16.mxu0 0
        %455 = vmatpush1.bf16.msra.mxu0 %v445
        %456 = vmatprep.subr.bf16.mxu0 0
        %457 = vmatpush1.bf16.msra.mxu0 0
        %458 = vmatprep.subr.bf16.mxu0 0
        %459 = vmatpush1.bf16.msra.mxu0 0
        %460 = vmatprep.subr.bf16.mxu0 0
        %461 = vmatpush1.bf16.msra.mxu0 0
        %462 = vmatprep.subr.bf16.mxu0 0
        %463 = vmatpush1.bf16.msra.mxu0 0
        %464 = vmatprep.subr.bf16.mxu0 0
        %465 = vmatpush1.bf16.msra.mxu0 0
        %466 = vmatprep.subr.bf16.mxu0 0
        %467 = vmatpush1.bf16.msra.mxu0 0
        %468 = vmatprep.subr.bf16.mxu0 0
        %469 = vmatpush1.bf16.msra.mxu0 0
        %470 = vmatprep.subr.bf16.mxu0 0
        %471 = vmatpush1.bf16.msra.mxu0 0
        %472 = vmatprep.subr.bf16.mxu0 0
        %473 = vmatpush1.bf16.msra.mxu0 0
        %474 = vmatprep.subr.bf16.mxu0 0
        %475 = vmatpush1.bf16.msra.mxu0 0
        %476 = vmatprep.subr.bf16.mxu0 0
        %477 = vmatpush1.bf16.msra.mxu0 0
        %478 = vmatprep.subr.bf16.mxu0 0
        %479 = vmatpush1.bf16.msra.mxu0 0
        %480 = vmatprep.subr.bf16.mxu0 0
        %481 = vmatpush1.bf16.msra.mxu0 0
        %482 = vmatprep.subr.bf16.mxu0 0
        %483 = vmatpush1.bf16.msra.mxu0 0
        %484 = vmatprep.mubr.bf16.mxu0 0
        %485 = vmatmul.mubr.bf16.gmra.mrb[0].mxu0 %v450
        %v486 = vpop.f32.mrb[0].mxu0
        %v487 = vadd.f32 %v434, %v486
        %v488 = vpop.f32.mrb[0].mxu0
        %v489 = vpop.f32.mrb[0].mxu0
        %v490 = vpop.f32.mrb[0].mxu0
        %491 = vdwg.mxu0
        %492 = vmax.xlane.f32.xlu0 %v487
        %v493 = vpop.xlane.xlu0 %492
        %v494 = vsub.f32 %v487, %v493
        %v495 = vmul.f32 %v494, 1.442695
        %v496 = vpow.pop %v495
        %497 = vadd.xlane.f32.xlu0 %v496
        %v498 = vpop.xlane.xlu0 %497
        %v499 = vlog2.pop %v498
        %v500 = vmul.f32 %v499, 0.6931472
        %v501 = vsub.f32 %v494, %v500
        %502 = vst [vmem:[%s242] sm:$0xff] %v501
        %s503 = sand.u32 %s159, 1
        %s504 = scalar_lea.sflag [#allocation3], %s503
        %s505 = sand.u32 %s159, 1
        %s506 = smul.addr %s505, 8
        %s507 = scalar_lea.vmem [#allocation2], %s506
        // Predicated region
        $region45: #{tpu_custom_call.1} parent=43 // pred_check
          %p508 = pneg %p169
        $region46: #{tpu_custom_call.1} parent=43 // pred_check_branch
          %510 = sbr.rel (%p508) target = $region48
        $region47: #{tpu_custom_call.1} parent=43 // pred_region
          %s512 = ssub.s32 128, 128
          %513 = vsyncadd %s504, %s512
          %s514 = smul.addr %s20, 128
          %s515 = scalar_lea.hbm %s6, %s514
          %s517 = sshll.u32 %s507, 4
          %s518 = int_to_ptr.vmem [resolvable:$true] %s517
          %520 = dma.vmem_to_hbm [thread:$0]  %s518, 128, %s515, %s504
        $region48: #{tpu_custom_call.1} parent=43 // pred_fallthru
          _
      $region44: #{tpu_custom_call.1} parent=5 // pred_fallthru
        _
      %p521 = scmp.le.s32.totalorder 2, %s15
      // Predicated region
      $region49: #{tpu_custom_call.1} parent=5 // pred_check
        %p522 = pneg %p521
      $region50: #{tpu_custom_call.1} parent=5 // pred_check_branch
        %524 = sbr.rel (%p522) target = $region52
      $region51: #{tpu_custom_call.1} parent=5 // pred_region
        %s525 = ssub.s32 %s15, 2
        // Predicated region
        $region53: #{tpu_custom_call.1} parent=51 // pred_check
          %p526 = pneg %p175
        $region54: #{tpu_custom_call.1} parent=51 // pred_check_branch
          %528 = sbr.rel (%p526) target = $region56
        $region55: #{tpu_custom_call.1} parent=51 // pred_region
          %s529 = sand.u32 %s160, 1
          %s530 = scalar_lea.sflag [#allocation3], %s529
          %s531 = sand.u32 %s160, 1
          %s532 = smul.addr %s531, 8
          %s533 = scalar_lea.vmem [#allocation2], %s532
          %534 = dma.done %s530, 128
        $region56: #{tpu_custom_call.1} parent=51 // pred_fallthru
          _
      $region52: #{tpu_custom_call.1} parent=5 // pred_fallthru
        _
    $region6: #{tpu_custom_call.1} parent=1 // loop_footer
      %s19 = sadd.s32 1, %s15
    $region7: #{tpu_custom_call.1} parent=1 // loop_footer_branch
      %14 = sbr.rel target = $region3
    $region8: #{tpu_custom_call.1} parent=1 // loop_exit
      _
    %535 = vsyncpa [#allocation3], 1
    %s536 = scalar_lea.sflag [#allocation3], 1
    %537 = vsyncpa %s536, 1

</llo_original>
